<compile_context>
chip_gen: v6e
topology: v6e:2x2x1
jax: 0.10.0
libtpu: 0.0.40
codegen_flags: <defaults>
</compile_context>

<pallas_src>
import functools
import math

import jax
import jax.numpy as jnp
from jax.experimental import pallas as pl
from jax.experimental.pallas import tpu as pltpu


def _round_up(x, m):
    return ((x + m - 1) // m) * m


# ----------------------------------------------------------------------------
# Pallas kernel: fused head  sigmoid(relu(hu + hm) . w2 + b2) [* scale + off]
# Layout: batch on the lane axis (lane-dense), hidden units on sublanes.
# ----------------------------------------------------------------------------
def _head_kernel(hu_ref, hm_ref, w2_ref, b2_ref, o_ref, *, minmax):
    # hu_ref / hm_ref : [H, tb] stream dtype (bf16/f32); b1 already folded in.
    # w2_ref          : [H, 1]  f32  (resident across the grid)
    # b2_ref          : [1, 1]  f32  (resident)
    # o_ref           : [1, tb] f32  (lane-dense output row)
    h = hu_ref[...].astype(jnp.float32) + hm_ref[...].astype(jnp.float32)
    h = jnp.maximum(h, 0.0)                               # ReLU (VPU, f32)
    # Second Linear (H -> 1) as a VPU multiply + sublane reduction: avoids a
    # K=H, N=1 MXU pass that would waste a full systolic-array issue.
    y = jnp.sum(h * w2_ref[...], axis=0, keepdims=True) + b2_ref[...]  # [1, tb]
    out = jax.nn.sigmoid(y)
    if minmax is not None:
        scale, offset = minmax                            # pre-folded affine
        out = out * scale + offset
    o_ref[...] = out.astype(o_ref.dtype)


# ----------------------------------------------------------------------------
# One-time parameter prep (hoisted out of the per-batch hot path)
# ----------------------------------------------------------------------------
def prepare_tables(params, stream_dtype=jnp.bfloat16):
    """Precompute per-user / per-item hidden pre-activations.

    feats @ W1 + b1 == PU[user] + PM[item] with
      PU = U @ W1[:F] + b1   (bias folded in here)
      PM = M @ W1[F:]
    Tables are stored pre-transposed ([H, n]) and pre-cast to `stream_dtype`
    so the per-batch wrapper is a single lane-dense gather per stream.
    """
    u_emb = params["u_weight"].astype(jnp.float32)    # [n_users, F]
    m_emb = params["m_weight"].astype(jnp.float32)    # [n_items, F]
    w1 = params["w1"].astype(jnp.float32)             # [2F, H]
    b1 = params["b1"].astype(jnp.float32)             # [1, H]
    F = u_emb.shape[1]

    pu = jnp.dot(u_emb, w1[:F], preferred_element_type=jnp.float32) + b1
    pm = jnp.dot(m_emb, w1[F:], preferred_element_type=jnp.float32)

    return {
        "pu_t": pu.T.astype(stream_dtype),             # [H, n_users]
        "pm_t": pm.T.astype(stream_dtype),             # [H, n_items]
        "w2_col": params["w2"].astype(jnp.float32).reshape(-1, 1),   # [H, 1]
        "b2": params["b2"].astype(jnp.float32).reshape(1, 1),        # [1, 1]
    }


# ----------------------------------------------------------------------------
# Forward pass wrapper
# ----------------------------------------------------------------------------
def embedding_net_forward(users, items, params=None, minmax=None,
                          block_b=131072, tables=None,
                          stream_dtype=jnp.bfloat16):
    """EmbeddingNet forward; the fused MLP head runs as a Pallas TPU kernel.

    users, items : int [B]
    params       : dict (Linear weights stored [in, out], see init_params);
                   only needed if `tables` is not supplied.
    minmax       : optional (min_rating, max_rating)
    block_b      : max batch tile along the lane axis (multiple of 128).
                   Default 131072 keeps the double-buffered VMEM footprint
                   ~11.5 MB (bf16) — safe on v5e/v6e/v7x.
    tables       : output of prepare_tables(); pass it to keep the one-time
                   table projection out of the per-call hot path.
    stream_dtype : dtype of the streamed hu/hm operands (bf16 or f32).
    """
    if block_b <= 0 or block_b % 128 != 0:
        raise ValueError("block_b must be a positive multiple of 128")
    if tables is None:
        if params is None:
            raise ValueError("need either `params` or precomputed `tables`")
        tables = prepare_tables(params, stream_dtype)

    pu_t = tables["pu_t"]                  # [H, n_users], stream dtype
    pm_t = tables["pm_t"]                  # [H, n_items], stream dtype
    w2_col = tables["w2_col"]              # [H, 1] f32
    b2_sc = tables["b2"]                   # [1, 1] f32
    H = pu_t.shape[0]

    # ---- Batch padding / balanced lane-dense tiling --------------------------
    B = users.shape[0]
    B_128 = _round_up(B, 128)
    tb = min(block_b, B_128)
    num_tiles = -(-B_128 // tb)                       # cdiv
    tb = _round_up(-(-B_128 // num_tiles), 128)       # balance; last tile not
    B_pad = num_tiles * tb                            # mostly padding
    pad = B_pad - B

    users_p = jnp.pad(users.astype(jnp.int32), (0, pad))   # pad with index 0
    items_p = jnp.pad(items.astype(jnp.int32), (0, pad))

    # Lane-dense gather straight out of the pre-transposed, pre-cast tables:
    # one gather per stream, no transpose pass, no f32 intermediate.
    hu_t = jnp.take(pu_t, users_p, axis=1)            # [H, B_pad]
    hm_t = jnp.take(pm_t, items_p, axis=1)            # [H, B_pad]

    # Pre-fold the minmax affine into two static scalars (one FMA in-kernel).
    if minmax is not None:
        mn, mx = float(minmax[0]), float(minmax[1])
        minmax = (mx - mn + 1.0, mn - 0.5)            # (scale, offset)
    kernel = functools.partial(_head_kernel, minmax=minmax)

    itemsize = jnp.dtype(hu_t.dtype).itemsize
    cost = pl.CostEstimate(
        flops=5 * B_pad * H + 2 * B_pad,          # add/relu/mul/reduce + FMA
        transcendentals=B_pad,                    # one sigmoid per example
        bytes_accessed=(2 * B_pad * H * itemsize  # hu/hm streams
                        + B_pad * 4               # f32 output row
                        + (H + 1) * 4),           # resident w2 / b2
    )

    out_row = pl.pallas_call(
        kernel,
        out_shape=jax.ShapeDtypeStruct((1, B_pad), jnp.float32),
        grid=(num_tiles,),
        in_specs=[
            pl.BlockSpec((H, tb), lambda i: (0, i)),   # hu tile (streamed)
            pl.BlockSpec((H, tb), lambda i: (0, i)),   # hm tile (streamed)
            pl.BlockSpec((H, 1), lambda i: (0, 0)),    # w2 (resident)
            pl.BlockSpec((1, 1), lambda i: (0, 0)),    # b2 (resident)
        ],
        out_specs=pl.BlockSpec((1, tb), lambda i: (0, i)),   # lane-dense row
        compiler_params=pltpu.CompilerParams(
            dimension_semantics=("parallel",)),        # megacore on v7x
        cost_estimate=cost,
    )(hu_t, hm_t, w2_col, b2_sc)

    return out_row.reshape(-1)[:B, None]               # [B, 1]


# ----------------------------------------------------------------------------
# Deterministic parameter init mirroring EmbeddingNet._init()
# ----------------------------------------------------------------------------
def init_params(key, n_users, n_items, n_factors=50, hidden=10):
    k_u, k_m, k_w1, k_w2 = jax.random.split(key, 4)

    def xavier_uniform(k, fan_in, fan_out):
        bound = math.sqrt(6.0 / (fan_in + fan_out))
        # stored as [in, out] (transpose of torch's [out, in])
        return jax.random.uniform(k, (fan_in, fan_out), jnp.float32,
                                  minval=-bound, maxval=bound)

    return {
        # embeddings ~ U(-0.05, 0.05)
        "u_weight": jax.random.uniform(k_u, (n_users, n_factors), jnp.float32,
                                       minval=-0.05, maxval=0.05),
        "m_weight": jax.random.uniform(k_m, (n_items, n_factors), jnp.float32,
                                       minval=-0.05, maxval=0.05),
        # hidden Linear(2F -> H), xavier_uniform weight, bias = 0.01
        "w1": xavier_uniform(k_w1, 2 * n_factors, hidden),
        "b1": jnp.full((1, hidden), 0.01, jnp.float32),
        # fc Linear(H -> 1)
        "w2": xavier_uniform(k_w2, hidden, 1),
        "b2": jnp.full((1, 1), 0.01, jnp.float32),
    }


# ----------------------------------------------------------------------------
# Pure-JAX f32 reference (for correctness check)
# ----------------------------------------------------------------------------
def reference_forward(users, items, params, minmax=None):
    feats = jnp.concatenate(
        [params["u_weight"][users], params["m_weight"][items]], axis=1)
    h = jnp.maximum(feats @ params["w1"] + params["b1"], 0.0)
    out = jax.nn.sigmoid(h @ params["w2"] + params["b2"])
    if minmax is not None:
        mn, mx = minmax
        out = out * (mx - mn + 1.0) + mn - 0.5
    return out


if __name__ == "__main__":
    n_users, n_items = 16, 16
    n_factors, hidden = 50, 10

    key = jax.random.PRNGKey(0)
    k_params, k_users, k_items = jax.random.split(key, 3)
    params = init_params(k_params, n_users, n_items, n_factors, hidden)

    # One-time table prep (hoisted out of the per-batch hot path).
    tables_bf16 = prepare_tables(params, jnp.bfloat16)
    tables_f32 = prepare_tables(params, jnp.float32)

    # Small batch (single padded tile): default path and minmax path.
    batch = 8
    users = jax.random.randint(k_users, (batch,), 0, n_users, dtype=jnp.int32)
    items = jax.random.randint(k_items, (batch,), 0, n_items, dtype=jnp.int32)

    out = jax.block_until_ready(
        embedding_net_forward(users, items, tables=tables_bf16))
    out_mm = jax.block_until_ready(
        embedding_net_forward(users, items, tables=tables_bf16,
                              minmax=(1.0, 5.0)))

    ref = reference_forward(users, items, params)
    ref_mm = reference_forward(users, items, params, minmax=(1.0, 5.0))

    assert out.shape == (batch, 1)
    assert jnp.allclose(out, ref, atol=1e-2, rtol=1e-2)
    assert jnp.allclose(out_mm, ref_mm, atol=1e-2, rtol=1e-2)

    # f32-stream path (exact parity; what you'd pick on v7x/v6e).
    out_f32 = jax.block_until_ready(
        embedding_net_forward(users, items, tables=tables_f32,
                              stream_dtype=jnp.float32, minmax=(1.0, 5.0)))
    assert jnp.allclose(out_f32, ref_mm, atol=1e-5, rtol=1e-5)

    # Ragged, multi-tile batch (exercises padding + the pipelined grid).
    batch2 = 300
    k_u2, k_i2 = jax.random.split(jax.random.PRNGKey(1))
    users2 = jax.random.randint(k_u2, (batch2,), 0, n_users, dtype=jnp.int32)
    items2 = jax.random.randint(k_i2, (batch2,), 0, n_items, dtype=jnp.int32)
    out2 = jax.block_until_ready(
        embedding_net_forward(users2, items2, tables=tables_bf16,
                              minmax=(1.0, 5.0), block_b=128))
    ref2 = reference_forward(users2, items2, params, minmax=(1.0, 5.0))
    assert out2.shape == (batch2, 1)
    assert jnp.allclose(out2, ref2, atol=1e-2, rtol=1e-2)

    # Path without precomputed tables (prep happens inside the call).
    out3 = jax.block_until_ready(
        embedding_net_forward(users, items, params, minmax=(1.0, 5.0)))
    assert jnp.allclose(out3, ref_mm, atol=1e-2, rtol=1e-2)

    print("KERNEL_OK")
</pallas_src>

<mosaic_0001>
module attributes {stable_mosaic.version = 11 : i64} {
  func.func @_head_kernel(%arg0: i32, %arg1: memref<10x128xbf16, #tpu.memory_space<vmem>>, %arg2: memref<10x128xbf16, #tpu.memory_space<vmem>>, %arg3: memref<10x1xf32, #tpu.memory_space<vmem>>, %arg4: memref<1x1xf32, #tpu.memory_space<vmem>>, %arg5: memref<1x128xf32, #tpu.memory_space<vmem>>) attributes {dimension_semantics = [#tpu.dimension_semantics<parallel>], iteration_bounds = array<i64: 1>, scalar_prefetch = 0 : i64, scratch_operands = 0 : i64, tpu.core_type = #tpu.core_type<tc>, window_params = [{transform_indices = @transform_0, window_bounds = array<i64: 10, 128>}, {transform_indices = @transform_1, window_bounds = array<i64: 10, 128>}, {pipeline_mode = #tpu.pipeline_mode<synchronous>, transform_indices = @transform_2, window_bounds = array<i64: 10, 1>}, {pipeline_mode = #tpu.pipeline_mode<synchronous>, transform_indices = @transform_3, window_bounds = array<i64: 1, 1>}, {transform_indices = @transform_4, window_bounds = array<i64: 1, 128>}]} {
    %c0 = arith.constant 0 : index
    %c0_0 = arith.constant 0 : index
    %0 = vector.load %arg1[%c0, %c0_0] : memref<10x128xbf16, #tpu.memory_space<vmem>>, vector<10x128xbf16>
    %1 = arith.extf %0 : vector<10x128xbf16> to vector<10x128xf32>
    %c0_1 = arith.constant 0 : index
    %c0_2 = arith.constant 0 : index
    %2 = vector.load %arg2[%c0_1, %c0_2] : memref<10x128xbf16, #tpu.memory_space<vmem>>, vector<10x128xbf16>
    %3 = arith.extf %2 : vector<10x128xbf16> to vector<10x128xf32>
    %4 = arith.addf %1, %3 : vector<10x128xf32>
    %cst = arith.constant 0.000000e+00 : f32
    %5 = vector.broadcast %cst : f32 to vector<10x128xf32>
    %6 = arith.maximumf %4, %5 : vector<10x128xf32>
    %c0_3 = arith.constant 0 : index
    %c0_4 = arith.constant 0 : index
    %7 = vector.load %arg3[%c0_3, %c0_4] : memref<10x1xf32, #tpu.memory_space<vmem>>, vector<10x1xf32>
    %8 = vector.broadcast %7 : vector<10x1xf32> to vector<10x128xf32>
    %9 = arith.mulf %6, %8 : vector<10x128xf32>
    %cst_5 = arith.constant dense<0.000000e+00> : vector<128xf32>
    %10 = vector.multi_reduction <add>, %9, %cst_5 [0] : vector<10x128xf32> to vector<128xf32>
    %11 = vector.shape_cast %10 : vector<128xf32> to vector<1x128xf32>
    %c0_6 = arith.constant 0 : index
    %c0_7 = arith.constant 0 : index
    %12 = vector.load %arg4[%c0_6, %c0_7] : memref<1x1xf32, #tpu.memory_space<vmem>>, vector<1x1xf32>
    %13 = vector.broadcast %12 : vector<1x1xf32> to vector<1x128xf32>
    %14 = arith.addf %11, %13 : vector<1x128xf32>
    %15 = arith.negf %14 : vector<1x128xf32>
    %16 = math.exp %15 : vector<1x128xf32>
    %cst_8 = arith.constant 1.000000e+00 : f32
    %17 = vector.broadcast %cst_8 : f32 to vector<1x128xf32>
    %18 = arith.addf %17, %16 : vector<1x128xf32>
    %19 = arith.divf %17, %18 : vector<1x128xf32>
    %c0_9 = arith.constant 0 : index
    %c0_10 = arith.constant 0 : index
    %20 = vector.load %arg5[%c0_9, %c0_10] : memref<1x128xf32, #tpu.memory_space<vmem>>, vector<1x128xf32>
    tpu.vector_store %arg5[%c0_9, %c0_10], %19 {strides = array<i32>} : memref<1x128xf32, #tpu.memory_space<vmem>>, vector<1x128xf32>,
    return
  }
  func.func @transform_0(%arg0: i32) -> (i32, i32) {
    %c0_i32 = arith.constant 0 : i32
    %c0_i32_0 = arith.constant 0 : i32
    return %c0_i32, %arg0 : i32, i32
  }
  func.func @transform_1(%arg0: i32) -> (i32, i32) {
    %c0_i32 = arith.constant 0 : i32
    %c0_i32_0 = arith.constant 0 : i32
    return %c0_i32, %arg0 : i32, i32
  }
  func.func @transform_2(%arg0: i32) -> (i32, i32) {
    %c0_i32 = arith.constant 0 : i32
    %c0_i32_0 = arith.constant 0 : i32
    %c0_i32_1 = arith.constant 0 : i32
    return %c0_i32, %c0_i32_0 : i32, i32
  }
  func.func @transform_3(%arg0: i32) -> (i32, i32) {
    %c0_i32 = arith.constant 0 : i32
    %c0_i32_0 = arith.constant 0 : i32
    %c0_i32_1 = arith.constant 0 : i32
    return %c0_i32, %c0_i32_0 : i32, i32
  }
  func.func @transform_4(%arg0: i32) -> (i32, i32) {
    %c0_i32 = arith.constant 0 : i32
    %c0_i32_0 = arith.constant 0 : i32
    return %c0_i32, %arg0 : i32, i32
  }
}

</mosaic_0001>

<llo_original>
// kernel: tpu_custom_call.1
$region0: #{tpu_custom_call.1}
  #allocation0 [shape = 'u32[]', space=smem, size = 0x4, offset = 0x4, fixed_abs, tag = 'smem constant byte address 0x4 - core index']
  #allocation1 [shape = 'u32[144,128]{1,0:T(1,128)}', space=vmem, size = 0x12000, scoped, tag = 'internal scratch']
  #allocation2 [shape = 'f32[1,1]{1,0:T(1,128)S(1)}', space=vmem, size = 0x200, scoped, tag = 'scoped memory for tpu_custom_call.1']
  %s0 = inlined_call_operand.vmem [shape: bf16[10,128], index: 0, kind: input, shape index: {}]
  %s1 = inlined_call_operand.vmem [shape: bf16[10,128], index: 1, kind: input, shape index: {}]
  %s2 = inlined_call_operand.vmem [shape: f32[10,1], index: 2, kind: input, shape index: {}]
  %s3 = inlined_call_operand.<no memory space> [shape: f32[1,1], index: 3, kind: input, shape index: {}]
  %s4 = inlined_call_operand.hbm [shape: f32[1,128], index: 4, kind: output, shape index: {}]
  %s5 = sld [smem:[#allocation0]]
  $region26: #{tpu_custom_call.1} parent=0
    _
  %s7 = ssub.s32 1, %s5
  %s8 = scalar_select 0, %s7, %s5
  %v9 = vstv %s3
  %10 = vst [vmem:[#allocation2] sm:$0x1] %v9
  $region1: #{tpu_custom_call.1} parent=0
    #allocation3 [shape = 'u8[512]{0}', space=vmem, size = 0x400, scoped, tag = 'output window, operand 0, single buffered']
    #allocation4 [shape = 's32[1]{0}', space=sflag, size = 0x4, scoped, tag = 'scoped memory for tpu_custom_call.1']
    %11 = vsyncpa [#allocation4], 0
    // Predicated region
    $region2: #{tpu_custom_call.1} parent=1 // pred_check
      _
    $region3: #{tpu_custom_call.1} parent=1 // pred_check_branch
      %13 = sbr.rel (0) target = $region5
    $region4: #{tpu_custom_call.1} parent=1 // pred_region
      _
    $region5: #{tpu_custom_call.1} parent=1 // pred_fallthru
      _
    // Predicated region
    $region6: #{tpu_custom_call.1} parent=1 // pred_check
      _
    $region7: #{tpu_custom_call.1} parent=1 // pred_check_branch
      %15 = sbr.rel (0) target = $region9
    $region8: #{tpu_custom_call.1} parent=1 // pred_region
      _
    $region9: #{tpu_custom_call.1} parent=1 // pred_fallthru
      _
    // Predicated region
    $region10: #{tpu_custom_call.1} parent=1 // pred_check
      _
    $region11: #{tpu_custom_call.1} parent=1 // pred_check_branch
      %17 = sbr.rel (0) target = $region13
    $region12: #{tpu_custom_call.1} parent=1 // pred_region
      _
    $region13: #{tpu_custom_call.1} parent=1 // pred_fallthru
      _
    // Predicated region
    $region14: #{tpu_custom_call.1} parent=1 // pred_check
      _
    $region15: #{tpu_custom_call.1} parent=1 // pred_check_branch
      %19 = sbr.rel (0) target = $region17
    $region16: #{tpu_custom_call.1} parent=1 // pred_region
      _
    $region17: #{tpu_custom_call.1} parent=1 // pred_fallthru
      _
    %v20 = vld [vmem:[%s0] sm:$0xf]
    %v21 = vld [vmem:[%s0 + $0x4] sm:$0x1]
    %v22 = vunpack.c.l.bf16 %v20
    %v23 = vunpack.c.l.bf16 %v21
    %v24 = vld [vmem:[%s1] sm:$0xf]
    %v25 = vld [vmem:[%s1 + $0x4] sm:$0x1]
    %v26 = vunpack.c.l.bf16 %v24
    %v27 = vunpack.c.l.bf16 %v25
    %v28 = vadd.f32 %v22, %v26
    %v29 = vadd.f32 %v23, %v27
    %v30 = vmax.f32 %v28, 0.0
    %v31 = vmax.f32 %v29, 0.0
    %v32 = vld [vmem:[%s2] sm:$0xff]
    %v33 = vld [vmem:[%s2 + $0x8] sm:$0x3]
    %35 = vset.pattern.permute.xlu0 0
    %36 = vperm.xlu0 %35, %v32
    %v37 = vpop.permute.xlu0 %36
    %40 = vset.pattern.permute.xlu0 0
    %41 = vperm.xlu0 %40, %v33
    %v42 = vpop.permute.xlu0 %41
    %v44 = vmul.f32 %v30, %v37
    %v45 = vmul.f32 %v31, %v42
    %vm46 = vcmask 1041408
    %v47 = vsel %vm46, %v45, 0.0
    %v48 = vadd.f32 %v44, %v47
    %v49 = vrot.slane %v48, 4
    %v50 = vadd.f32 %v48, %v49
    %v51 = vrot.slane %v50, 2
    %v52 = vadd.f32 %v50, %v51
    %v53 = vrot.slane %v52, 1
    %v54 = vadd.f32 %v52, %v53
    %v55 = vld [vmem:[#allocation2] sm:$0x1]
    %57 = vset.pattern.permute.xlu0 0
    %58 = vperm.xlu0 %57, %v55
    %v59 = vpop.permute.xlu0 %58
    %v61 = vlaneseq
    %v62 = vshrl.u32 %v61, 7
    %v63 = vsub.s32 0, %v62
    %v64 = vrot.slane %v59, %v63
    %v65 = vadd.f32 %v54, %v64
    %v66 = vxor.u32 %v65, 2147483648
    %v67 = vmul.f32 %v66, 1.442695
    %v68 = vpow.pop %v67
    %v69 = vadd.f32 %v68, 1.0
    %v70 = vrcp.pop %v69
    %v71 = vmul.f32 1.0, %v70
    %72 = vst [vmem:[#allocation3] sm:$0x1] %v71
    // Predicated region
    $region18: #{tpu_custom_call.1} parent=1 // pred_check
      _
    $region19: #{tpu_custom_call.1} parent=1 // pred_check_branch
      %74 = sbr.rel (0) target = $region21
    $region20: #{tpu_custom_call.1} parent=1 // pred_region
      %s76 = ssub.s32 16, 16
      %77 = vsyncadd [#allocation4], %s76
      %s79 = sshll.u32 [#allocation3], 4
      %s80 = int_to_ptr.vmem [resolvable:$true] %s79
      %82 = dma.vmem_to_hbm [thread:$0]  %s80, 16, %s4, [#allocation4]
    $region21: #{tpu_custom_call.1} parent=1 // pred_fallthru
      _
    // Predicated region
    $region22: #{tpu_custom_call.1} parent=1 // pred_check
      _
    $region23: #{tpu_custom_call.1} parent=1 // pred_check_branch
      %84 = sbr.rel (0) target = $region25
    $region24: #{tpu_custom_call.1} parent=1 // pred_region
      %85 = dma.done [#allocation4], 16
    $region25: #{tpu_custom_call.1} parent=1 // pred_fallthru
      _
    %86 = vsyncpa [#allocation4], 1

</llo_original>
